<compile_context>
chip_gen: v7x
topology: tpu7x:2x2x1
jax: 0.10.0
libtpu: 0.0.40
codegen_flags: <defaults>
</compile_context>

<pallas_src>
import math
from typing import List

import jax
import jax.numpy as jnp
from jax.experimental import pallas as pl
from jax.experimental.pallas import tpu as pltpu


# ----------------------------------------------------------------------------
# Kernel: y = x * scale + bias   (scale/bias are (1, W) rows, broadcast over rows)
# ----------------------------------------------------------------------------
def _affine_kernel(x_ref, scale_ref, bias_ref, o_ref):
    o_ref[...] = x_ref[...] * scale_ref[...] + bias_ref[...]


def _pick_row_tile(n_rows: int, width: int) -> int:
    """Largest row tile that keeps in+out double buffers within ~8 MiB of VMEM."""
    budget_rows = max(8, (8 * 1024 * 1024) // (4 * width * 4))  # 4 buffers x 4B
    tb = min(n_rows, budget_rows, 1024)
    if tb >= n_rows:
        return n_rows                    # single full block (any row count allowed)
    return max(8, (tb // 8) * 8)         # tiled blocks: multiple of 8 sublanes


def _apply_affine_2d(x2d, scale_row, bias_row):
    """x2d: (R, W) f32 with W a multiple of 128; scale/bias: (1, W) f32."""
    R, W = x2d.shape
    tb = _pick_row_tile(R, W)
    grid = (pl.cdiv(R, tb),)
    return pl.pallas_call(
        _affine_kernel,
        out_shape=jax.ShapeDtypeStruct((R, W), jnp.float32),
        grid_spec=pl.GridSpec(
            grid=grid,
            in_specs=[
                pl.BlockSpec((tb, W), lambda i: (i, 0)),   # x tile
                pl.BlockSpec((1, W), lambda i: (0, 0)),    # scale row (resident)
                pl.BlockSpec((1, W), lambda i: (0, 0)),    # bias row (resident)
            ],
            out_specs=pl.BlockSpec((tb, W), lambda i: (i, 0)),
        ),
        compiler_params=pltpu.CompilerParams(
            dimension_semantics=("parallel",),
        ),
    )(x2d, scale_row, bias_row)


# ----------------------------------------------------------------------------
# Precomputed affine parameters (scale/bias) with lane-dense layout variants.
# ----------------------------------------------------------------------------
class _AffineParams:
    def __init__(self, scale, bias):
        scale = jnp.asarray(scale, jnp.float32).reshape(-1)
        bias = jnp.asarray(bias, jnp.float32).reshape(-1)
        D = scale.shape[0]
        self.d = D
        self.scale = scale
        self.bias = bias
        # (1, D) row for the D % 128 == 0 case.
        self.row = (scale.reshape(1, D), bias.reshape(1, D))
        # Folded (1, 128) row if D divides 128: every 128-lane row repeats the pattern.
        if D % 128 != 0 and 128 % D == 0:
            reps = 128 // D
            self.folded = (
                jnp.tile(scale, reps).reshape(1, 128),
                jnp.tile(bias, reps).reshape(1, 128),
            )
        else:
            self.folded = None
        # Padded (1, Dp) row fallback (scale pads with 1, bias with 0 -> identity).
        if D % 128 != 0:
            Dp = (-(-D // 128)) * 128
            self.dp = Dp
            self.padded = (
                jnp.pad(scale, (0, Dp - D), constant_values=1.0).reshape(1, Dp),
                jnp.pad(bias, (0, Dp - D)).reshape(1, Dp),
            )
        else:
            self.dp = D
            self.padded = None


def _apply_affine(x, params: _AffineParams):
    """y = x * scale + bias with a lane-dense Pallas kernel; x shape (..., D)."""
    x = jnp.asarray(x, jnp.float32)
    orig_shape = x.shape
    D = params.d
    B = math.prod(orig_shape[:-1]) if len(orig_shape) > 1 else 1
    x2 = x.reshape(B, D)

    if D % 128 == 0:
        sr, br = params.row
        y = _apply_affine_2d(x2, sr, br)
    elif params.folded is not None and (B * D) % 128 == 0:
        # Fold (B, D) -> (B*D/128, 128); feature pattern repeats within each row.
        sr, br = params.folded
        y = _apply_affine_2d(x2.reshape((B * D) // 128, 128), sr, br).reshape(B, D)
    else:
        # Fallback: pad feature dim up to a multiple of 128 (identity on the pad).
        sr, br = params.padded
        Dp = params.dp
        xp = jnp.pad(x2, ((0, 0), (0, Dp - D)))
        y = _apply_affine_2d(xp, sr, br)[:, :D]

    return y.reshape(orig_shape)


# ----------------------------------------------------------------------------
# GaussianNormalizer / Normalizer (JAX mirrors; forward runs in Pallas)
# ----------------------------------------------------------------------------
class GaussianNormalizer:
    def __init__(self, shape: List[int], eps: float = 1e-8, verbose: int = 0):
        self.shape = shape
        self.verbose = verbose
        self.eps = float(eps)
        self.mean = jnp.zeros(shape, dtype=jnp.float32)
        self.std = jnp.ones(shape, dtype=jnp.float32)
        self.n = 0
        self._version = 0
        self._refresh_affine()

    def _refresh_affine(self):
        s = jnp.maximum(jnp.asarray(self.std, jnp.float32), self.eps)
        m = jnp.asarray(self.mean, jnp.float32)
        fwd_scale = 1.0 / s                       # exact reciprocal, computed once
        self._affine = {
            False: _AffineParams(fwd_scale, -m * fwd_scale),   # (x - m)/s == x*(1/s) - m/s
            True: _AffineParams(s, m),                          # x*s + m
        }
        self._version += 1

    def __call__(self, x, inverse: bool = False):
        return _apply_affine(x, self._affine[bool(inverse)])

    # Running-statistics update (host-side bookkeeping, plain JAX — not a kernel).
    def update(self, samples):
        samples = jnp.asarray(samples, jnp.float32)
        if self.n == 0:
            self.mean = samples.mean(axis=0)
            self.std = samples.std(axis=0, ddof=1)      # torch .std default: unbiased
            self.n = samples.shape[0]
        else:
            old_mean, old_std, old_n = self.mean, self.std, self.n
            samples = samples - old_mean
            n = samples.shape[0]
            delta = samples.mean(axis=0)
            new_n = old_n + n
            new_mean = old_mean + delta * n / new_n
            new_std = jnp.sqrt(
                (old_std ** 2 * old_n
                 + samples.var(axis=0, ddof=1) * n
                 + delta ** 2 * old_n * n / new_n) / new_n)
            self.mean, self.std, self.n = new_mean, new_std, new_n
        self._refresh_affine()

    def state_dict(self):
        return {"mean": self.mean, "std": self.std, "n": self.n}

    def load_state_dict(self, state_dict):
        self.mean = jnp.asarray(state_dict["mean"], jnp.float32)
        self.std = jnp.asarray(state_dict["std"], jnp.float32)
        self.n = state_dict["n"]
        self._refresh_affine()


class Normalizer:
    """JAX mirror of the PyTorch Normalizer container (forwards run in Pallas)."""

    def __init__(self, state_dim: int, action_dim: int, verbose: int = 0):
        self.state_dim = state_dim
        self.action_dim = action_dim
        self.action_normalizer = GaussianNormalizer([action_dim], verbose=verbose)
        self.state_normalizer = GaussianNormalizer([state_dim], verbose=verbose)
        self.diff_normalizer = GaussianNormalizer([state_dim], verbose=verbose)
        self._fused_cache = {}

    # PyTorch Normalizer.forward raises NotImplemented; usable forwards are below.
    def normalize_state(self, s, inverse=False):
        return self.state_normalizer(s, inverse=inverse)

    def normalize_action(self, a, inverse=False):
        return self.action_normalizer(a, inverse=inverse)

    def normalize_diff(self, d, inverse=False):
        return self.diff_normalizer(d, inverse=inverse)

    def _fused_params(self, inverse: bool) -> _AffineParams:
        key = (bool(inverse),
               self.state_normalizer._version,
               self.action_normalizer._version,
               self.diff_normalizer._version)
        p = self._fused_cache.get(key)
        if p is None:
            ps = self.state_normalizer._affine[bool(inverse)]
            pa = self.action_normalizer._affine[bool(inverse)]
            pd = self.diff_normalizer._affine[bool(inverse)]
            p = _AffineParams(
                jnp.concatenate([ps.scale, pa.scale, pd.scale]),
                jnp.concatenate([ps.bias, pa.bias, pd.bias]),
            )
            self._fused_cache = {key: p}
        return p

    def normalize_all(self, state, action, diff, inverse=False):
        """Fused: one pallas_call over the concatenated (state|action|diff) features."""
        x = jnp.concatenate(
            [jnp.asarray(state, jnp.float32),
             jnp.asarray(action, jnp.float32),
             jnp.asarray(diff, jnp.float32)], axis=-1)
        y = _apply_affine(x, self._fused_params(inverse))
        ds, da = self.state_dim, self.action_dim
        return y[..., :ds], y[..., ds:ds + da], y[..., ds + da:]


# ----------------------------------------------------------------------------
# Demo / correctness checks
# ----------------------------------------------------------------------------
if __name__ == "__main__":
    key = jax.random.PRNGKey(0)
    k_s, k_a, k_d, k_xs, k_xa, k_xd, k_w = jax.random.split(key, 7)

    batch = 8
    state_dim = 32
    action_dim = 16

    norm = Normalizer(state_dim, action_dim)

    # Populate running statistics deterministically (simulating .update()).
    norm.state_normalizer.update(2.0 * jax.random.normal(k_s, (64, state_dim)) + 1.5)
    norm.action_normalizer.update(0.5 * jax.random.normal(k_a, (64, action_dim)) - 0.3)
    norm.diff_normalizer.update(3.0 * jax.random.normal(k_d, (64, state_dim)))

    xs = jax.random.normal(k_xs, (batch, state_dim), dtype=jnp.float32)
    xa = jax.random.normal(k_xa, (batch, action_dim), dtype=jnp.float32)
    xd = jax.random.normal(k_xd, (batch, state_dim), dtype=jnp.float32)

    # Individual Pallas forwards (folded lane-dense path: D=16/32 -> 128 lanes).
    ys = norm.normalize_state(xs)
    ya = norm.normalize_action(xa)
    yd = norm.normalize_diff(xd)
    ys_inv = norm.normalize_state(ys, inverse=True)   # round-trip

    # Fused forward: one pallas_call for all three (padded lane-dense path, D=80->128).
    fs, fa, fd = norm.normalize_all(xs, xa, xd)

    # Extra path check: feature dim already a multiple of 128.
    gn128 = GaussianNormalizer([128])
    gn128.update(1.7 * jax.random.normal(k_w, (64, 128)) + 0.2)
    xw = jax.random.normal(k_w, (16, 128), dtype=jnp.float32)
    yw = gn128(xw)

    jax.block_until_ready((ys, ya, yd, ys_inv, fs, fa, fd, yw))

    # Pure-JAX reference.
    def ref(x, m, s, eps=1e-8, inverse=False):
        s = jnp.maximum(s, eps)
        return x * s + m if inverse else (x - m) / s

    assert jnp.allclose(ys, ref(xs, norm.state_normalizer.mean, norm.state_normalizer.std),
                        atol=1e-5, rtol=1e-5)
    assert jnp.allclose(ya, ref(xa, norm.action_normalizer.mean, norm.action_normalizer.std),
                        atol=1e-5, rtol=1e-5)
    assert jnp.allclose(yd, ref(xd, norm.diff_normalizer.mean, norm.diff_normalizer.std),
                        atol=1e-5, rtol=1e-5)
    assert jnp.allclose(ys_inv, xs, atol=1e-4, rtol=1e-4)
    assert jnp.allclose(fs, ys, atol=1e-5, rtol=1e-5)
    assert jnp.allclose(fa, ya, atol=1e-5, rtol=1e-5)
    assert jnp.allclose(fd, yd, atol=1e-5, rtol=1e-5)
    assert jnp.allclose(yw, ref(xw, gn128.mean, gn128.std), atol=1e-5, rtol=1e-5)

    print("KERNEL_OK")
</pallas_src>

<mosaic_0001>
module attributes {stable_mosaic.version = 11 : i64} {
  func.func @_affine_kernel(%arg0: i32, %arg1: memref<2x128xf32, #tpu.memory_space<vmem>>, %arg2: memref<1x128xf32, #tpu.memory_space<vmem>>, %arg3: memref<1x128xf32, #tpu.memory_space<vmem>>, %arg4: memref<2x128xf32, #tpu.memory_space<vmem>>) attributes {dimension_semantics = [#tpu.dimension_semantics<parallel>], iteration_bounds = array<i64: 1>, scalar_prefetch = 0 : i64, scratch_operands = 0 : i64, tpu.core_type = #tpu.core_type<tc>, window_params = [{transform_indices = @transform_0, window_bounds = array<i64: 2, 128>}, {pipeline_mode = #tpu.pipeline_mode<synchronous>, transform_indices = @transform_1, window_bounds = array<i64: 1, 128>}, {pipeline_mode = #tpu.pipeline_mode<synchronous>, transform_indices = @transform_2, window_bounds = array<i64: 1, 128>}, {transform_indices = @transform_3, window_bounds = array<i64: 2, 128>}]} {
    %c0 = arith.constant 0 : index
    %c0_0 = arith.constant 0 : index
    %0 = vector.load %arg1[%c0, %c0_0] : memref<2x128xf32, #tpu.memory_space<vmem>>, vector<2x128xf32>
    %c0_1 = arith.constant 0 : index
    %c0_2 = arith.constant 0 : index
    %1 = vector.load %arg2[%c0_1, %c0_2] : memref<1x128xf32, #tpu.memory_space<vmem>>, vector<1x128xf32>
    %2 = vector.broadcast %1 : vector<1x128xf32> to vector<2x128xf32>
    %3 = arith.mulf %0, %2 : vector<2x128xf32>
    %c0_3 = arith.constant 0 : index
    %c0_4 = arith.constant 0 : index
    %4 = vector.load %arg3[%c0_3, %c0_4] : memref<1x128xf32, #tpu.memory_space<vmem>>, vector<1x128xf32>
    %5 = vector.broadcast %4 : vector<1x128xf32> to vector<2x128xf32>
    %6 = arith.addf %3, %5 : vector<2x128xf32>
    %c0_5 = arith.constant 0 : index
    %c0_6 = arith.constant 0 : index
    %7 = vector.load %arg4[%c0_5, %c0_6] : memref<2x128xf32, #tpu.memory_space<vmem>>, vector<2x128xf32>
    tpu.vector_store %arg4[%c0_5, %c0_6], %6 {strides = array<i32>} : memref<2x128xf32, #tpu.memory_space<vmem>>, vector<2x128xf32>,
    return
  }
  func.func @transform_0(%arg0: i32) -> (i32, i32) {
    %c0_i32 = arith.constant 0 : i32
    %c0_i32_0 = arith.constant 0 : i32
    return %arg0, %c0_i32 : i32, i32
  }
  func.func @transform_1(%arg0: i32) -> (i32, i32) {
    %c0_i32 = arith.constant 0 : i32
    %c0_i32_0 = arith.constant 0 : i32
    %c0_i32_1 = arith.constant 0 : i32
    return %c0_i32, %c0_i32_0 : i32, i32
  }
  func.func @transform_2(%arg0: i32) -> (i32, i32) {
    %c0_i32 = arith.constant 0 : i32
    %c0_i32_0 = arith.constant 0 : i32
    %c0_i32_1 = arith.constant 0 : i32
    return %c0_i32, %c0_i32_0 : i32, i32
  }
  func.func @transform_3(%arg0: i32) -> (i32, i32) {
    %c0_i32 = arith.constant 0 : i32
    %c0_i32_0 = arith.constant 0 : i32
    return %arg0, %c0_i32 : i32, i32
  }
}

</mosaic_0001>

<llo_original>
// kernel: tpu_custom_call.1
$region0: #{tpu_custom_call.1}
  #allocation0 [shape = 'u32[]', space=smem, size = 0x4, offset = 0x4, fixed_abs, tag = 'smem constant byte address 0x4 - core index']
  #allocation1 [shape = 'u32[144,128]{1,0:T(1,128)}', space=vmem, size = 0x12000, scoped, tag = 'internal scratch']
  %s0 = inlined_call_operand.hbm [shape: f32[2,128], index: 0, kind: input, shape index: {}]
  %s1 = inlined_call_operand.vmem [shape: f32[1,128], index: 1, kind: input, shape index: {}]
  %s2 = inlined_call_operand.vmem [shape: f32[1,128], index: 2, kind: input, shape index: {}]
  %s3 = inlined_call_operand.hbm [shape: f32[2,128], index: 3, kind: output, shape index: {}]
  %s4 = sld [smem:[#allocation0]]
  $region26: #{tpu_custom_call.1} parent=0
    _
  %s6 = ssub.s32 1, %s4
  %s7 = scalar_select 0, %s6, %s4
  $region1: #{tpu_custom_call.1} parent=0
    #allocation2 [shape = 'u8[1024]{0}', space=vmem, size = 0x400, scoped, tag = 'input window, operand 0, single buffered']
    #allocation3 [shape = 's32[1]{0}', space=sflag, size = 0x4, scoped, tag = 'scoped memory for tpu_custom_call.1']
    #allocation4 [shape = 's32[1]{0}', space=sflag, size = 0x4, scoped, tag = 'scoped memory for tpu_custom_call.1']
    #allocation5 [shape = 'u8[1024]{0}', space=vmem, size = 0x400, scoped, tag = 'output window, operand 0, single buffered']
    %8 = vsyncpa [#allocation3], 0
    %9 = vsyncpa [#allocation4], 0
    // Predicated region
    $region2: #{tpu_custom_call.1} parent=1 // pred_check
      _
    $region3: #{tpu_custom_call.1} parent=1 // pred_check_branch
      %11 = sbr.rel (0) target = $region5
    $region4: #{tpu_custom_call.1} parent=1 // pred_region
      %s13 = ssub.s32 32, 32
      %14 = vsyncadd [#allocation3], %s13
      %s16 = sshll.u32 [#allocation2], 4
      %s17 = int_to_ptr.vmem [resolvable:$true] %s16
      %19 = dma.hbm_to_vmem [thread:$0]  %s0, 32, %s17, [#allocation3]
    $region5: #{tpu_custom_call.1} parent=1 // pred_fallthru
      _
    // Predicated region
    $region6: #{tpu_custom_call.1} parent=1 // pred_check
      _
    $region7: #{tpu_custom_call.1} parent=1 // pred_check_branch
      %21 = sbr.rel (0) target = $region9
    $region8: #{tpu_custom_call.1} parent=1 // pred_region
      _
    $region9: #{tpu_custom_call.1} parent=1 // pred_fallthru
      _
    // Predicated region
    $region10: #{tpu_custom_call.1} parent=1 // pred_check
      _
    $region11: #{tpu_custom_call.1} parent=1 // pred_check_branch
      %23 = sbr.rel (0) target = $region13
    $region12: #{tpu_custom_call.1} parent=1 // pred_region
      _
    $region13: #{tpu_custom_call.1} parent=1 // pred_fallthru
      _
    // Predicated region
    $region14: #{tpu_custom_call.1} parent=1 // pred_check
      _
    $region15: #{tpu_custom_call.1} parent=1 // pred_check_branch
      %25 = sbr.rel (0) target = $region17
    $region16: #{tpu_custom_call.1} parent=1 // pred_region
      %26 = dma.done [#allocation3], 32
    $region17: #{tpu_custom_call.1} parent=1 // pred_fallthru
      _
    %v27 = vld [vmem:[#allocation2] sm:$0x3]
    %v28 = vld [vmem:[%s1] sm:$0x1]
    %v30 = vlaneseq
    %v31 = vshrl.u32 %v30, 7
    %v32 = vsub.s32 0, %v31
    %v33 = vrot.slane %v28, %v32
    %v35 = vmul.f32 %v27, %v33
    %v36 = vld [vmem:[%s2] sm:$0x1]
    %v38 = vlaneseq
    %v39 = vshrl.u32 %v38, 7
    %v40 = vsub.s32 0, %v39
    %v41 = vrot.slane %v36, %v40
    %v43 = vadd.f32 %v35, %v41
    %44 = vst [vmem:[#allocation5] sm:$0x3] %v43
    // Predicated region
    $region18: #{tpu_custom_call.1} parent=1 // pred_check
      _
    $region19: #{tpu_custom_call.1} parent=1 // pred_check_branch
      %46 = sbr.rel (0) target = $region21
    $region20: #{tpu_custom_call.1} parent=1 // pred_region
      %s48 = ssub.s32 32, 32
      %49 = vsyncadd [#allocation4], %s48
      %s51 = sshll.u32 [#allocation5], 4
      %s52 = int_to_ptr.vmem [resolvable:$true] %s51
      %54 = dma.vmem_to_hbm [thread:$0]  %s52, 32, %s3, [#allocation4]
    $region21: #{tpu_custom_call.1} parent=1 // pred_fallthru
      _
    // Predicated region
    $region22: #{tpu_custom_call.1} parent=1 // pred_check
      _
    $region23: #{tpu_custom_call.1} parent=1 // pred_check_branch
      %56 = sbr.rel (0) target = $region25
    $region24: #{tpu_custom_call.1} parent=1 // pred_region
      %57 = dma.done [#allocation4], 32
    $region25: #{tpu_custom_call.1} parent=1 // pred_fallthru
      _
    %58 = vsyncpa [#allocation3], 1
    %59 = vsyncpa [#allocation4], 1

</llo_original>
